<compile_context>
chip_gen: v6e
topology: v6e:2x2x1
jax: 0.10.0
libtpu: 0.0.40
codegen_flags: <defaults>
</compile_context>

<pallas_src>
import jax
import jax.numpy as jnp
from jax.experimental import pallas as pl
from jax.experimental.pallas import tpu as pltpu

_LANES = 128


def _round_up(x, m):
    return ((x + m - 1) // m) * m


def _policy_kernel(xT_ref, w1_ref, b1_ref, w2_ref, b2_ref, out_ref):
    # xT: (S, TB) with batch on lanes; w1: (H, S); b1: (H, 1); w2: (A, H);
    # b2: (A, 1); out: (A, TB).
    # fc1 + relu:  hT[:, j] = relu(w1 @ xT[:, j] + b1)     (MXU + VPU)
    hT = jnp.dot(w1_ref[...], xT_ref[...], preferred_element_type=jnp.float32)
    hT = jnp.maximum(hT + b1_ref[...], 0.0)

    # fc2
    logitsT = jnp.dot(w2_ref[...], hT, preferred_element_type=jnp.float32) + b2_ref[...]

    # Softmax over the action axis (axis 0 here == dim=1 of the batch-major
    # view).  Strictly per-column, so garbage columns in a partial tail block
    # stay isolated and are discarded by the masked tail store.
    m = jnp.max(logitsT, axis=0, keepdims=True)
    e = jnp.exp(logitsT - m)
    denom = jnp.sum(e, axis=0, keepdims=True)
    # Exact divide (not pl.reciprocal approx): keeps rows exactly normalized
    # for downstream log(probs); this kernel is nowhere near VALU-bound.
    out_ref[...] = (e / denom).astype(out_ref.dtype)


def policy_forward(state, w1, b1, w2, b2, *, block_b=256, bf16_inputs=False):
    """Policy forward pass.

    state: [B, S] float32
    w1:    [H, S]  (PyTorch fc1.weight layout)   b1: [H]
    w2:    [A, H]  (PyTorch fc2.weight layout)   b2: [A]
    returns probs [B, A] float32 (softmax over actions).
    """
    B, S = state.shape
    H = w1.shape[0]
    A = w2.shape[0]

    # Batch-on-lanes: transpose once in the wrapper (layout plumbing) so the
    # kernel's state DMA and output store are lane-dense.
    x_t = state.T                                   # [S, B]
    b1_2d = b1.reshape(H, 1).astype(jnp.float32)    # broadcast along lanes
    b2_2d = b2.reshape(A, 1).astype(jnp.float32)

    if bf16_inputs:
        # HBM-bound on the state stream: bf16 halves input bytes and doubles
        # vreg packing.  Accumulation / bias / softmax stay f32.
        x_t = x_t.astype(jnp.bfloat16)
        w1 = w1.astype(jnp.bfloat16)
        w2 = w2.astype(jnp.bfloat16)

    # Batch tile (lane axis):
    #  * multiple of 128 lanes -> unmasked vst except on the ragged tail.
    #  * VMEM is NOT the constraint (tiles are tens of KiB on every generation,
    #    including v7x); sized by vreg pressure (hT tile (H, TB) f32 ~= H*TB/1024
    #    vregs) and by amortizing ~0.35us per grid step for big rollout batches.
    #  * capped near B/2 so the "parallel" axis yields >=2 blocks for v7x's two
    #    TensorCores once B is large enough.
    block_b = max(_LANES, _round_up(block_b, _LANES))
    half_b = max(_LANES, _round_up(pl.cdiv(B, 2), _LANES))
    TB = min(block_b, half_b)
    grid = (pl.cdiv(B, TB),)   # ragged tail = Pallas partial block, no pad copy

    in_bytes = x_t.dtype.itemsize
    flops = 2 * B * (S * H + H * A)
    transcendentals = B * A
    bytes_accessed = in_bytes * (B * S + H * S + A * H) + 4 * (H + A + B * A)

    out_t = pl.pallas_call(
        _policy_kernel,
        out_shape=jax.ShapeDtypeStruct((A, B), jnp.float32),
        grid=grid,
        in_specs=[
            pl.BlockSpec((S, TB), lambda i: (0, i)),  # stateT: tiled over batch lanes
            pl.BlockSpec((H, S), lambda i: (0, 0)),   # w1: grid-invariant VMEM resident
            pl.BlockSpec((H, 1), lambda i: (0, 0)),   # b1
            pl.BlockSpec((A, H), lambda i: (0, 0)),   # w2
            pl.BlockSpec((A, 1), lambda i: (0, 0)),   # b2
        ],
        out_specs=pl.BlockSpec((A, TB), lambda i: (0, i)),
        compiler_params=pltpu.CompilerParams(
            dimension_semantics=("parallel",),  # batch blocks are independent
        ),
        cost_estimate=pl.CostEstimate(
            flops=flops,
            transcendentals=transcendentals,
            bytes_accessed=bytes_accessed,
        ),
    )(x_t, w1, b1_2d, w2, b2_2d)

    return out_t.T  # [B, A]


def init_policy_params(key, state_size, hidden, action_size):
    """Deterministic init mimicking nn.Linear's uniform(-1/sqrt(fan_in), ...).

    Weights are stored in PyTorch [out_features, in_features] layout, which is
    exactly the layout the feature-major kernel consumes (no transpose needed).
    """
    k1, k2, k3, k4 = jax.random.split(key, 4)
    bound1 = 1.0 / jnp.sqrt(jnp.float32(state_size))
    bound2 = 1.0 / jnp.sqrt(jnp.float32(hidden))
    w1 = jax.random.uniform(k1, (hidden, state_size), jnp.float32, -bound1, bound1)
    b1 = jax.random.uniform(k2, (hidden,), jnp.float32, -bound1, bound1)
    w2 = jax.random.uniform(k3, (action_size, hidden), jnp.float32, -bound2, bound2)
    b2 = jax.random.uniform(k4, (action_size,), jnp.float32, -bound2, bound2)
    return w1, b1, w2, b2


def _reference(state, w1, b1, w2, b2):
    h = jnp.maximum(state @ w1.T + b1, 0.0)
    logits = h @ w2.T + b2
    return jax.nn.softmax(logits, axis=1)


if __name__ == "__main__":
    # Small shapes consistent with the module: CartPole-like
    # state_size=4, hidden_layers=[32], action_size=2, batch=8.
    B, S, H, A = 8, 4, 32, 2

    key = jax.random.PRNGKey(0)
    k_params, k_state, k_big = jax.random.split(key, 3)
    w1, b1, w2, b2 = init_policy_params(k_params, S, H, A)
    state = jax.random.normal(k_state, (B, S), jnp.float32)

    probs = policy_forward(state, w1, b1, w2, b2)
    jax.block_until_ready(probs)
    probs_ref = _reference(state, w1, b1, w2, b2)
    assert probs.shape == (B, A), "wrong output shape"
    assert jnp.allclose(probs, probs_ref, atol=1e-4, rtol=1e-4), "mismatch vs reference"
    assert jnp.allclose(jnp.sum(probs, axis=1), 1.0, atol=1e-4), "rows must sum to ~1"

    # Bigger ragged batch: exercises >1 grid block (both v7x TCs) and the masked
    # partial tail block (no host-side pad copy, B not a multiple of 128).
    B2 = 300
    state2 = jax.random.normal(k_big, (B2, S), jnp.float32)
    probs2 = policy_forward(state2, w1, b1, w2, b2, block_b=256)
    jax.block_until_ready(probs2)
    probs2_ref = _reference(state2, w1, b1, w2, b2)
    assert probs2.shape == (B2, A), "tail columns must be dropped by masked store"
    assert jnp.allclose(probs2, probs2_ref, atol=1e-4, rtol=1e-4), "tiled-path mismatch"
    assert jnp.allclose(jnp.sum(probs2, axis=1), 1.0, atol=1e-4), "rows must sum to ~1"

    # Optional bf16 input/weight stream for large-batch rollouts; softmax stays f32.
    probs3 = policy_forward(state2, w1, b1, w2, b2, block_b=256, bf16_inputs=True)
    jax.block_until_ready(probs3)
    assert probs3.shape == (B2, A)
    assert jnp.allclose(probs3, probs2_ref, atol=5e-2, rtol=5e-2), "bf16-path mismatch"
    assert jnp.allclose(jnp.sum(probs3, axis=1), 1.0, atol=1e-3), "bf16 rows must sum to ~1"

    print("KERNEL_OK")
</pallas_src>

<mosaic_0001>
module attributes {stable_mosaic.version = 11 : i64} {
  func.func @_policy_kernel(%arg0: i32, %arg1: memref<4x128xf32, #tpu.memory_space<vmem>>, %arg2: memref<32x4xf32, #tpu.memory_space<vmem>>, %arg3: memref<32x1xf32, #tpu.memory_space<vmem>>, %arg4: memref<2x32xf32, #tpu.memory_space<vmem>>, %arg5: memref<2x1xf32, #tpu.memory_space<vmem>>, %arg6: memref<2x128xf32, #tpu.memory_space<vmem>>) attributes {dimension_semantics = [#tpu.dimension_semantics<parallel>], iteration_bounds = array<i64: 1>, scalar_prefetch = 0 : i64, scratch_operands = 0 : i64, tpu.core_type = #tpu.core_type<tc>, window_params = [{transform_indices = @transform_0, window_bounds = array<i64: 4, 128>}, {pipeline_mode = #tpu.pipeline_mode<synchronous>, transform_indices = @transform_1, window_bounds = array<i64: 32, 4>}, {pipeline_mode = #tpu.pipeline_mode<synchronous>, transform_indices = @transform_2, window_bounds = array<i64: 32, 1>}, {pipeline_mode = #tpu.pipeline_mode<synchronous>, transform_indices = @transform_3, window_bounds = array<i64: 2, 32>}, {pipeline_mode = #tpu.pipeline_mode<synchronous>, transform_indices = @transform_4, window_bounds = array<i64: 2, 1>}, {transform_indices = @transform_5, window_bounds = array<i64: 2, 128>}]} {
    %c0 = arith.constant 0 : index
    %c0_0 = arith.constant 0 : index
    %0 = vector.load %arg2[%c0, %c0_0] : memref<32x4xf32, #tpu.memory_space<vmem>>, vector<32x4xf32>
    %c0_1 = arith.constant 0 : index
    %c0_2 = arith.constant 0 : index
    %1 = vector.load %arg1[%c0_1, %c0_2] : memref<4x128xf32, #tpu.memory_space<vmem>>, vector<4x128xf32>
    %cst = arith.constant dense<0.000000e+00> : vector<32x128xf32>
    %2 = tpu.matmul %0, %1, %cst {dimension_numbers = #tpu.dot_dimension_numbers<[1], [0], [0], [1], [0, 0, 1, 1], [], []>} : vector<32x4xf32>, vector<4x128xf32>, vector<32x128xf32> -> vector<32x128xf32>
    %c0_3 = arith.constant 0 : index
    %c0_4 = arith.constant 0 : index
    %3 = vector.load %arg3[%c0_3, %c0_4] : memref<32x1xf32, #tpu.memory_space<vmem>>, vector<32x1xf32>
    %4 = vector.broadcast %3 : vector<32x1xf32> to vector<32x128xf32>
    %5 = arith.addf %2, %4 : vector<32x128xf32>
    %cst_5 = arith.constant 0.000000e+00 : f32
    %6 = vector.broadcast %cst_5 : f32 to vector<32x128xf32>
    %7 = arith.maximumf %5, %6 : vector<32x128xf32>
    %c0_6 = arith.constant 0 : index
    %c0_7 = arith.constant 0 : index
    %8 = vector.load %arg4[%c0_6, %c0_7] : memref<2x32xf32, #tpu.memory_space<vmem>>, vector<2x32xf32>
    %cst_8 = arith.constant dense<0.000000e+00> : vector<2x128xf32>
    %9 = tpu.matmul %8, %7, %cst_8 {dimension_numbers = #tpu.dot_dimension_numbers<[1], [0], [0], [1], [0, 0, 1, 1], [], []>} : vector<2x32xf32>, vector<32x128xf32>, vector<2x128xf32> -> vector<2x128xf32>
    %c0_9 = arith.constant 0 : index
    %c0_10 = arith.constant 0 : index
    %10 = vector.load %arg5[%c0_9, %c0_10] : memref<2x1xf32, #tpu.memory_space<vmem>>, vector<2x1xf32>
    %11 = vector.broadcast %10 : vector<2x1xf32> to vector<2x128xf32>
    %12 = arith.addf %9, %11 : vector<2x128xf32>
    %cst_11 = arith.constant dense<0xFF800000> : vector<128xf32>
    %13 = vector.multi_reduction <maximumf>, %12, %cst_11 [0] : vector<2x128xf32> to vector<128xf32>
    %14 = vector.shape_cast %13 : vector<128xf32> to vector<1x128xf32>
    %15 = vector.broadcast %14 : vector<1x128xf32> to vector<2x128xf32>
    %16 = arith.subf %12, %15 : vector<2x128xf32>
    %17 = math.exp %16 : vector<2x128xf32>
    %cst_12 = arith.constant dense<0.000000e+00> : vector<128xf32>
    %18 = vector.multi_reduction <add>, %17, %cst_12 [0] : vector<2x128xf32> to vector<128xf32>
    %19 = vector.shape_cast %18 : vector<128xf32> to vector<1x128xf32>
    %20 = vector.broadcast %19 : vector<1x128xf32> to vector<2x128xf32>
    %21 = arith.divf %17, %20 : vector<2x128xf32>
    %c0_13 = arith.constant 0 : index
    %c0_14 = arith.constant 0 : index
    %22 = vector.load %arg6[%c0_13, %c0_14] : memref<2x128xf32, #tpu.memory_space<vmem>>, vector<2x128xf32>
    tpu.vector_store %arg6[%c0_13, %c0_14], %21 {strides = array<i32>} : memref<2x128xf32, #tpu.memory_space<vmem>>, vector<2x128xf32>,
    return
  }
  func.func @transform_0(%arg0: i32) -> (i32, i32) {
    %c0_i32 = arith.constant 0 : i32
    %c0_i32_0 = arith.constant 0 : i32
    return %c0_i32, %arg0 : i32, i32
  }
  func.func @transform_1(%arg0: i32) -> (i32, i32) {
    %c0_i32 = arith.constant 0 : i32
    %c0_i32_0 = arith.constant 0 : i32
    %c0_i32_1 = arith.constant 0 : i32
    return %c0_i32, %c0_i32_0 : i32, i32
  }
  func.func @transform_2(%arg0: i32) -> (i32, i32) {
    %c0_i32 = arith.constant 0 : i32
    %c0_i32_0 = arith.constant 0 : i32
    %c0_i32_1 = arith.constant 0 : i32
    return %c0_i32, %c0_i32_0 : i32, i32
  }
  func.func @transform_3(%arg0: i32) -> (i32, i32) {
    %c0_i32 = arith.constant 0 : i32
    %c0_i32_0 = arith.constant 0 : i32
    %c0_i32_1 = arith.constant 0 : i32
    return %c0_i32, %c0_i32_0 : i32, i32
  }
  func.func @transform_4(%arg0: i32) -> (i32, i32) {
    %c0_i32 = arith.constant 0 : i32
    %c0_i32_0 = arith.constant 0 : i32
    %c0_i32_1 = arith.constant 0 : i32
    return %c0_i32, %c0_i32_0 : i32, i32
  }
  func.func @transform_5(%arg0: i32) -> (i32, i32) {
    %c0_i32 = arith.constant 0 : i32
    %c0_i32_0 = arith.constant 0 : i32
    return %c0_i32, %arg0 : i32, i32
  }
}

</mosaic_0001>

<llo_original>
// kernel: tpu_custom_call.1
$region0: #{tpu_custom_call.1}
  #allocation0 [shape = 'u32[]', space=smem, size = 0x4, offset = 0x4, fixed_abs, tag = 'smem constant byte address 0x4 - core index']
  #allocation1 [shape = 'u32[144,128]{1,0:T(1,128)}', space=vmem, size = 0x12000, scoped, tag = 'internal scratch']
  %s0 = inlined_call_operand.vmem [shape: f32[4,8], index: 0, kind: input, shape index: {}]
  %s1 = inlined_call_operand.vmem [shape: f32[32,4], index: 1, kind: input, shape index: {}]
  %s2 = inlined_call_operand.vmem [shape: f32[32,1], index: 2, kind: input, shape index: {}]
  %s3 = inlined_call_operand.vmem [shape: f32[2,32], index: 3, kind: input, shape index: {}]
  %s4 = inlined_call_operand.vmem [shape: f32[2,1], index: 4, kind: input, shape index: {}]
  %s5 = inlined_call_operand.hbm [shape: f32[2,8], index: 5, kind: output, shape index: {}]
  %s6 = sld [smem:[#allocation0]]
  $region30: #{tpu_custom_call.1} parent=0
    _
  %s8 = ssub.s32 1, %s6
  %s9 = scalar_select 0, %s8, %s6
  $region1: #{tpu_custom_call.1} parent=0
    #allocation2 [shape = 'u8[1024]{0}', space=vmem, size = 0x400, scoped, tag = 'output window, operand 0, single buffered']
    #allocation3 [shape = 's32[1]{0}', space=sflag, size = 0x4, scoped, tag = 'scoped memory for tpu_custom_call.1']
    %10 = vsyncpa [#allocation3], 0
    // Predicated region
    $region2: #{tpu_custom_call.1} parent=1 // pred_check
      _
    $region3: #{tpu_custom_call.1} parent=1 // pred_check_branch
      %12 = sbr.rel (0) target = $region5
    $region4: #{tpu_custom_call.1} parent=1 // pred_region
      _
    $region5: #{tpu_custom_call.1} parent=1 // pred_fallthru
      _
    // Predicated region
    $region6: #{tpu_custom_call.1} parent=1 // pred_check
      _
    $region7: #{tpu_custom_call.1} parent=1 // pred_check_branch
      %14 = sbr.rel (0) target = $region9
    $region8: #{tpu_custom_call.1} parent=1 // pred_region
      _
    $region9: #{tpu_custom_call.1} parent=1 // pred_fallthru
      _
    // Predicated region
    $region10: #{tpu_custom_call.1} parent=1 // pred_check
      _
    $region11: #{tpu_custom_call.1} parent=1 // pred_check_branch
      %16 = sbr.rel (0) target = $region13
    $region12: #{tpu_custom_call.1} parent=1 // pred_region
      _
    $region13: #{tpu_custom_call.1} parent=1 // pred_fallthru
      _
    // Predicated region
    $region14: #{tpu_custom_call.1} parent=1 // pred_check
      _
    $region15: #{tpu_custom_call.1} parent=1 // pred_check_branch
      %18 = sbr.rel (0) target = $region17
    $region16: #{tpu_custom_call.1} parent=1 // pred_region
      _
    $region17: #{tpu_custom_call.1} parent=1 // pred_fallthru
      _
    // Predicated region
    $region18: #{tpu_custom_call.1} parent=1 // pred_check
      _
    $region19: #{tpu_custom_call.1} parent=1 // pred_check_branch
      %20 = sbr.rel (0) target = $region21
    $region20: #{tpu_custom_call.1} parent=1 // pred_region
      _
    $region21: #{tpu_custom_call.1} parent=1 // pred_fallthru
      _
    %v21 = vld [vmem:[%s1] sm:$0xff]
    %v22 = vld [vmem:[%s1 + $0x8] sm:$0xff]
    %v23 = vld [vmem:[%s1 + $0x10] sm:$0xff]
    %v24 = vld [vmem:[%s1 + $0x18] sm:$0xff]
    %v25 = vld [vmem:[%s0] sm:$0xf]
    %v26 = vld [vmem:[%s2] sm:$0xff]
    %v27 = vld [vmem:[%s2 + $0x8] sm:$0xff]
    %v28 = vld [vmem:[%s2 + $0x10] sm:$0xff]
    %v29 = vld [vmem:[%s2 + $0x18] sm:$0xff]
    %31 = vset.pattern.permute.xlu0 0
    %32 = vperm.xlu0 %31, %v26
    %v33 = vpop.permute.xlu0 %32
    %36 = vset.pattern.permute.xlu0 0
    %37 = vperm.xlu0 %36, %v27
    %v38 = vpop.permute.xlu0 %37
    %41 = vset.pattern.permute.xlu0 0
    %42 = vperm.xlu0 %41, %v28
    %v43 = vpop.permute.xlu0 %42
    %46 = vset.pattern.permute.xlu0 0
    %47 = vperm.xlu0 %46, %v29
    %v48 = vpop.permute.xlu0 %47
    %vm50 = vcmask 31744
    %v52 = vsel %vm50, %v21, 0
    %v55 = vsel %vm50, %v22, 0
    %v58 = vsel %vm50, %v23, 0
    %v61 = vsel %vm50, %v24, 0
    %vm63 = vcmask 1043456
    %v65 = vsel %vm63, %v25, 0
    %67 = vmatprep.subr.mxu0 0.0
    %68 = vmatpush1.msra.mxu0 0.0
    %69 = vmatprep.subr.mxu0 0.0
    %70 = vmatpush1.msra.mxu0 0.0
    %71 = vmatprep.subr.mxu0 0.0
    %72 = vmatpush1.msra.mxu0 0.0
    %73 = vmatprep.subr.mxu0 0.0
    %74 = vmatpush1.msra.mxu0 0.0
    %75 = vmatprep.subr.mxu0 0.0
    %76 = vmatpush1.msra.mxu0 0.0
    %77 = vmatprep.subr.mxu0 0.0
    %78 = vmatpush1.msra.mxu0 0.0
    %79 = vmatprep.subr.mxu0 0.0
    %80 = vmatpush1.msra.mxu0 0.0
    %81 = vmatprep.subr.mxu0 0.0
    %82 = vmatpush1.msra.mxu0 0.0
    %83 = vmatprep.subr.mxu0 0.0
    %84 = vmatpush1.msra.mxu0 0.0
    %85 = vmatprep.subr.mxu0 0.0
    %86 = vmatpush1.msra.mxu0 0.0
    %87 = vmatprep.subr.mxu0 0.0
    %88 = vmatpush1.msra.mxu0 0.0
    %89 = vmatprep.subr.mxu0 0.0
    %90 = vmatpush1.msra.mxu0 0.0
    %91 = vmatprep.subr.mxu0 0.0
    %92 = vmatpush1.msra.mxu0 0.0
    %93 = vmatprep.subr.mxu0 0.0
    %94 = vmatpush1.msra.mxu0 0.0
    %95 = vmatprep.subr.mxu0 0.0
    %96 = vmatpush1.msra.mxu0 0.0
    %97 = vmatprep.subr.mxu0 0.0
    %98 = vmatpush1.msra.mxu0 %v65
    %99 = vmatprep.subr.mxu0 0.0
    %100 = vmatpush2.msra.mxu0 0.0
    %101 = vmatprep.subr.mxu0 0.0
    %102 = vmatpush2.msra.mxu0 0.0
    %103 = vmatprep.subr.mxu0 0.0
    %104 = vmatpush2.msra.mxu0 0.0
    %105 = vmatprep.subr.mxu0 0.0
    %106 = vmatpush2.msra.mxu0 0.0
    %107 = vmatprep.subr.mxu0 0.0
    %108 = vmatpush2.msra.mxu0 0.0
    %109 = vmatprep.subr.mxu0 0.0
    %110 = vmatpush2.msra.mxu0 0.0
    %111 = vmatprep.subr.mxu0 0.0
    %112 = vmatpush2.msra.mxu0 0.0
    %113 = vmatprep.subr.mxu0 0.0
    %114 = vmatpush2.msra.mxu0 0.0
    %115 = vmatprep.subr.mxu0 0.0
    %116 = vmatpush2.msra.mxu0 0.0
    %117 = vmatprep.subr.mxu0 0.0
    %118 = vmatpush2.msra.mxu0 0.0
    %119 = vmatprep.subr.mxu0 0.0
    %120 = vmatpush2.msra.mxu0 0.0
    %121 = vmatprep.subr.mxu0 0.0
    %122 = vmatpush2.msra.mxu0 0.0
    %123 = vmatprep.subr.mxu0 0.0
    %124 = vmatpush2.msra.mxu0 0.0
    %125 = vmatprep.subr.mxu0 0.0
    %126 = vmatpush2.msra.mxu0 0.0
    %127 = vmatprep.subr.mxu0 0.0
    %128 = vmatpush2.msra.mxu0 0.0
    %129 = vmatprep.subr.mxu0 0.0
    %130 = vmatpush2.msra.mxu0 0.0
    %131 = vmatprep.mubr.f32.mxu0 0.0
    %132 = vmatmul.mubr.f32.gmra.mxu0 %v52
    %v133 = vpop.f32.mrf.mxu0
    %v134 = vadd.f32 %v33, %v133
    %v135 = vpop.f32.mrf.mxu0
    %136 = vmatprep.mubr.f32.mxu0 0.0
    %137 = vmatmul.mubr.f32.gmra.mxu0 %v55
    %v138 = vpop.f32.mrf.mxu0
    %v139 = vadd.f32 %v38, %v138
    %v140 = vpop.f32.mrf.mxu0
    %141 = vmatprep.mubr.f32.mxu0 0.0
    %142 = vmatmul.mubr.f32.gmra.mxu0 %v58
    %v143 = vpop.f32.mrf.mxu0
    %v144 = vadd.f32 %v43, %v143
    %v145 = vpop.f32.mrf.mxu0
    %146 = vmatprep.mubr.f32.mxu0 0.0
    %147 = vmatmul.mubr.f32.gmra.mxu0 %v61
    %v148 = vpop.f32.mrf.mxu0
    %v149 = vadd.f32 %v48, %v148
    %v150 = vpop.f32.mrf.mxu0
    %151 = vdwg.mxu0
    %v152 = vmax.f32 %v134, 0.0
    %v153 = vmax.f32 %v139, 0.0
    %v154 = vmax.f32 %v144, 0.0
    %v155 = vmax.f32 %v149, 0.0
    %v156 = vld [vmem:[%s3] sm:$0x3]
    %v157 = vld [vmem:[%s4] sm:$0x3]
    %159 = vset.pattern.permute.xlu0 0
    %160 = vperm.xlu0 %159, %v157
    %v161 = vpop.permute.xlu0 %160
    %vm163 = vcmask 261120
    %v165 = vsel %vm163, %v156, 0
    %167 = vmatprep.subr.mxu0 0.0
    %168 = vmatpush1.msra.mxu0 0.0
    %169 = vmatprep.subr.mxu0 0.0
    %170 = vmatpush1.msra.mxu0 0.0
    %171 = vmatprep.subr.mxu0 0.0
    %172 = vmatpush1.msra.mxu0 0.0
    %173 = vmatprep.subr.mxu0 0.0
    %174 = vmatpush1.msra.mxu0 0.0
    %175 = vmatprep.subr.mxu0 0.0
    %176 = vmatpush1.msra.mxu0 0.0
    %177 = vmatprep.subr.mxu0 0.0
    %178 = vmatpush1.msra.mxu0 0.0
    %179 = vmatprep.subr.mxu0 0.0
    %180 = vmatpush1.msra.mxu0 0.0
    %181 = vmatprep.subr.mxu0 0.0
    %182 = vmatpush1.msra.mxu0 0.0
    %183 = vmatprep.subr.mxu0 0.0
    %184 = vmatpush1.msra.mxu0 0.0
    %185 = vmatprep.subr.mxu0 0.0
    %186 = vmatpush1.msra.mxu0 0.0
    %187 = vmatprep.subr.mxu0 0.0
    %188 = vmatpush1.msra.mxu0 0.0
    %189 = vmatprep.subr.mxu0 0.0
    %190 = vmatpush1.msra.mxu0 0.0
    %191 = vmatprep.subr.mxu0 0.0
    %192 = vmatpush1.msra.mxu0 %v155
    %193 = vmatprep.subr.mxu0 0.0
    %194 = vmatpush1.msra.mxu0 %v154
    %195 = vmatprep.subr.mxu0 0.0
    %196 = vmatpush1.msra.mxu0 %v153
    %197 = vmatprep.subr.mxu0 0.0
    %198 = vmatpush1.msra.mxu0 %v152
    %199 = vmatprep.subr.mxu0 0.0
    %200 = vmatpush2.msra.mxu0 0.0
    %201 = vmatprep.subr.mxu0 0.0
    %202 = vmatpush2.msra.mxu0 0.0
    %203 = vmatprep.subr.mxu0 0.0
    %204 = vmatpush2.msra.mxu0 0.0
    %205 = vmatprep.subr.mxu0 0.0
    %206 = vmatpush2.msra.mxu0 0.0
    %207 = vmatprep.subr.mxu0 0.0
    %208 = vmatpush2.msra.mxu0 0.0
    %209 = vmatprep.subr.mxu0 0.0
    %210 = vmatpush2.msra.mxu0 0.0
    %211 = vmatprep.subr.mxu0 0.0
    %212 = vmatpush2.msra.mxu0 0.0
    %213 = vmatprep.subr.mxu0 0.0
    %214 = vmatpush2.msra.mxu0 0.0
    %215 = vmatprep.subr.mxu0 0.0
    %216 = vmatpush2.msra.mxu0 0.0
    %217 = vmatprep.subr.mxu0 0.0
    %218 = vmatpush2.msra.mxu0 0.0
    %219 = vmatprep.subr.mxu0 0.0
    %220 = vmatpush2.msra.mxu0 0.0
    %221 = vmatprep.subr.mxu0 0.0
    %222 = vmatpush2.msra.mxu0 0.0
    %223 = vmatprep.subr.mxu0 0.0
    %224 = vmatpush2.msra.mxu0 0.0
    %225 = vmatprep.subr.mxu0 0.0
    %226 = vmatpush2.msra.mxu0 0.0
    %227 = vmatprep.subr.mxu0 0.0
    %228 = vmatpush2.msra.mxu0 0.0
    %229 = vmatprep.subr.mxu0 0.0
    %230 = vmatpush2.msra.mxu0 0.0
    %231 = vmatprep.mubr.f32.mxu0 0.0
    %232 = vmatmul.mubr.f32.gmra.mxu0 %v165
    %v233 = vpop.f32.mrf.mxu0
    %v234 = vadd.f32 %v161, %v233
    %v235 = vpop.f32.mrf.mxu0
    %236 = vdwg.mxu0
    %vm237 = vcmask 1041408
    %v238 = vsel %vm237, %v234, -inf
    %v239 = vrot.slane %v238, 4
    %v240 = vmax.f32 %v238, %v239
    %v241 = vrot.slane %v240, 2
    %v242 = vmax.f32 %v240, %v241
    %v243 = vrot.slane %v242, 1
    %v244 = vmax.f32 %v242, %v243
    %v245 = vsub.f32 %v234, %v244
    %v246 = vmul.f32 %v245, 1.442695
    %v247 = vpow.pop %v246
    %v248 = vsel %vm237, %v247, 0.0
    %v249 = vrot.slane %v248, 4
    %v250 = vadd.f32 %v248, %v249
    %v251 = vrot.slane %v250, 2
    %v252 = vadd.f32 %v250, %v251
    %v253 = vrot.slane %v252, 1
    %v254 = vadd.f32 %v252, %v253
    %v255 = vrcp.pop %v254
    %v256 = vmul.f32 %v247, %v255
    %257 = vst [vmem:[#allocation2] sm:$0x3] %v256
    // Predicated region
    $region22: #{tpu_custom_call.1} parent=1 // pred_check
      _
    $region23: #{tpu_custom_call.1} parent=1 // pred_check_branch
      %259 = sbr.rel (0) target = $region25
    $region24: #{tpu_custom_call.1} parent=1 // pred_region
      %s261 = ssub.s32 32, 32
      %262 = vsyncadd [#allocation3], %s261
      %s264 = sshll.u32 [#allocation2], 4
      %s265 = int_to_ptr.vmem [resolvable:$true] %s264
      %267 = dma.vmem_to_hbm [thread:$0]  %s265, 32, %s5, [#allocation3]
    $region25: #{tpu_custom_call.1} parent=1 // pred_fallthru
      _
    // Predicated region
    $region26: #{tpu_custom_call.1} parent=1 // pred_check
      _
    $region27: #{tpu_custom_call.1} parent=1 // pred_check_branch
      %269 = sbr.rel (0) target = $region29
    $region28: #{tpu_custom_call.1} parent=1 // pred_region
      %270 = dma.done [#allocation3], 32
    $region29: #{tpu_custom_call.1} parent=1 // pred_fallthru
      _
    %271 = vsyncpa [#allocation3], 1

</llo_original>
